<compile_context>
chip_gen: v6e
topology: v6e:2x2x1
jax: 0.10.0
libtpu: 0.0.40
codegen_flags: <defaults>
</compile_context>

<pallas_src>
import functools

import jax
import jax.numpy as jnp
from jax.experimental import pallas as pl
from jax.experimental.pallas import tpu as pltpu

_LANE = 128


def _round_up(x: int, m: int) -> int:
    return ((x + m - 1) // m) * m


def _sublane(dtype) -> int:
    # Minimum second-to-last tile dim: 8 for f32, 16 for bf16, 32 for int8/fp8.
    return max(8, 32 // jnp.dtype(dtype).itemsize)


def linear_kernel(x_ref, wt_ref, b_ref, o_ref):
    # x_ref : (tm, tk)  activation tile
    # wt_ref: (tk, tn)  weight tile, pre-transposed to (D_in, D_out) layout
    # b_ref : (1,  tn)  bias tile (same block index for every k -> resident)
    # o_ref : (tm, tn)  f32 output tile; index map ignores k, so it stays
    #                   resident across the K loop and doubles as accumulator.
    k = pl.program_id(2)
    prod = jnp.dot(x_ref[...], wt_ref[...], preferred_element_type=jnp.float32)

    @pl.when(k == 0)
    def _first():
        o_ref[...] = prod          # no zero-init store on the first K step

    @pl.when(k != 0)
    def _accumulate():
        o_ref[...] += prod

    @pl.when(k == pl.num_programs(2) - 1)
    def _epilogue():
        o_ref[...] += b_ref[...]   # bias added exactly once


@functools.partial(jax.jit, static_argnames=("tm", "tn", "tk"))
def linear_forward(x, weight, bias, *, tm=256, tn=1024, tk=2048):
    """x: (B, D_in); weight: (D_out, D_in) [native PyTorch]; bias: (D_out,)."""
    B, D_in = x.shape
    D_out = weight.shape[0]
    sub = _sublane(x.dtype)

    # ---- K: full-K single block when it fits (no x padding, grid_K == 1) ----
    if D_in <= tk:
        tk_eff, K_pad = D_in, D_in
    else:
        tk_eff = tk                                   # multiple of 128
        K_pad = _round_up(D_in, tk_eff)

    # ---- N: lane-dense, maximize tn first so x streams from HBM once -------
    N_pad0 = _round_up(D_out, _LANE)
    grid_n = pl.cdiv(N_pad0, tn)
    tn_eff = _round_up(pl.cdiv(N_pad0, grid_n), _LANE)
    N_pad = grid_n * tn_eff

    # ---- M: size tiles to the batch; guarantee >=2 parallel blocks for v7x --
    grid_m = pl.cdiv(B, tm)
    if grid_m == 1 and grid_n == 1 and B >= 2 * sub:
        grid_m = 2                                    # use both v7x TensorCores
    tm_eff = _round_up(pl.cdiv(B, grid_m), sub)
    M_pad = grid_m * tm_eff

    grid = (grid_m, grid_n, K_pad // tk_eff)

    # ---- Padding (no-ops when already aligned; W/bias pads are tiny) --------
    x_p = x if (M_pad == B and K_pad == D_in) else jnp.pad(
        x, ((0, M_pad - B), (0, K_pad - D_in)))
    # One-time transpose to (D_in, D_out); in production store W this way.
    w_t = weight.T
    w_p = w_t if (K_pad == D_in and N_pad == D_out) else jnp.pad(
        w_t, ((0, K_pad - D_in), (0, N_pad - D_out)))
    b_p = bias if N_pad == D_out else jnp.pad(bias, (0, N_pad - D_out))
    b2d = b_p.reshape(1, N_pad)

    out_padded = pl.pallas_call(
        linear_kernel,
        out_shape=jax.ShapeDtypeStruct((M_pad, N_pad), jnp.float32),
        grid_spec=pltpu.PrefetchScalarGridSpec(
            num_scalar_prefetch=0,
            grid=grid,
            in_specs=[
                # x tile: varies with (i, k)
                pl.BlockSpec((tm_eff, tk_eff), lambda i, j, k: (i, k)),
                # pre-transposed weight tile: varies with (k, j)
                pl.BlockSpec((tk_eff, tn_eff), lambda i, j, k: (k, j)),
                # bias tile: varies with j only -> resident across K
                pl.BlockSpec((1, tn_eff), lambda i, j, k: (0, j)),
            ],
            # Output block ignores k -> resident accumulator across the K loop.
            out_specs=pl.BlockSpec((tm_eff, tn_eff), lambda i, j, k: (i, j)),
        ),
        compiler_params=pltpu.CompilerParams(
            dimension_semantics=("parallel", "parallel", "arbitrary"),
            vmem_limit_bytes=48 * 1024 * 1024,
        ),
    )(x_p, w_p, b2d)

    # Slice padding off; cast back to the input dtype (no-op for f32).
    return out_padded[:B, :D_out].astype(x.dtype)


def _reference(x, weight, bias):
    return x @ weight.T + bias


def _make_case(key, batch, d_in, d_out):
    kx, kw, kb = jax.random.split(key, 3)
    x = jax.random.normal(kx, (batch, d_in), dtype=jnp.float32)
    bound = 1.0 / (d_in ** 0.5)
    w = jax.random.uniform(kw, (d_out, d_in), minval=-bound, maxval=bound,
                           dtype=jnp.float32)
    b = jax.random.uniform(kb, (d_out,), minval=-bound, maxval=bound,
                           dtype=jnp.float32)
    return x, w, b


if __name__ == "__main__":
    key = jax.random.PRNGKey(0)
    k0, k1, k2 = jax.random.split(key, 3)

    # ---- Small demo shapes consistent with nn.Linear(input_dim, output_dim) --
    x, w, b = _make_case(k0, batch=8, d_in=32, d_out=16)
    out = jax.block_until_ready(linear_forward(x, w, b))
    assert out.shape == (8, 16)
    assert jnp.allclose(out, _reference(x, w, b), atol=1e-5, rtol=1e-5)

    # ---- Multi-M-block, no-padding path (grid 2x1x1, full-K block) ----------
    x2, w2, b2 = _make_case(k1, batch=384, d_in=640, d_out=384)
    out2 = jax.block_until_ready(linear_forward(x2, w2, b2))
    assert out2.shape == (384, 384)
    assert jnp.allclose(out2, _reference(x2, w2, b2), atol=1e-4, rtol=1e-4)

    # ---- K-tiled accumulation path + forced 2-way M split (v7x) -------------
    x3, w3, b3 = _make_case(k2, batch=64, d_in=4224, d_out=96)
    out3 = jax.block_until_ready(linear_forward(x3, w3, b3))
    assert out3.shape == (64, 96)
    assert jnp.allclose(out3, _reference(x3, w3, b3), atol=1e-4, rtol=1e-4)

    print("KERNEL_OK")
</pallas_src>

<mosaic_0001>
module attributes {stable_mosaic.version = 11 : i64} {
  func.func @linear_kernel(%arg0: i32, %arg1: i32, %arg2: i32, %arg3: memref<8x32xf32, #tpu.memory_space<vmem>>, %arg4: memref<32x128xf32, #tpu.memory_space<vmem>>, %arg5: memref<1x128xf32, #tpu.memory_space<vmem>>, %arg6: memref<8x128xf32, #tpu.memory_space<vmem>>) attributes {dimension_semantics = [#tpu.dimension_semantics<parallel>, #tpu.dimension_semantics<parallel>, #tpu.dimension_semantics<arbitrary>], iteration_bounds = array<i64: 1, 1, 1>, scalar_prefetch = 0 : i64, scratch_operands = 0 : i64, tpu.core_type = #tpu.core_type<tc>, window_params = [{transform_indices = @transform_0, window_bounds = array<i64: 8, 32>}, {transform_indices = @transform_1, window_bounds = array<i64: 32, 128>}, {transform_indices = @transform_2, window_bounds = array<i64: 1, 128>}, {transform_indices = @transform_3, window_bounds = array<i64: 8, 128>}]} {
    %c0 = arith.constant 0 : index
    %c0_0 = arith.constant 0 : index
    %0 = vector.load %arg3[%c0, %c0_0] : memref<8x32xf32, #tpu.memory_space<vmem>>, vector<8x32xf32>
    %c0_1 = arith.constant 0 : index
    %c0_2 = arith.constant 0 : index
    %1 = vector.load %arg4[%c0_1, %c0_2] : memref<32x128xf32, #tpu.memory_space<vmem>>, vector<32x128xf32>
    %cst = arith.constant dense<0.000000e+00> : vector<8x128xf32>
    %2 = tpu.matmul %0, %1, %cst {dimension_numbers = #tpu.dot_dimension_numbers<[1], [0], [0], [1], [0, 0, 1, 1], [], []>} : vector<8x32xf32>, vector<32x128xf32>, vector<8x128xf32> -> vector<8x128xf32>
    %c0_i32 = arith.constant 0 : i32
    %3 = arith.cmpi eq, %arg2, %c0_i32 : i32
    %4 = arith.extui %3 : i1 to i32
    %c0_i32_3 = arith.constant 0 : i32
    %5 = arith.cmpi ne, %4, %c0_i32_3 : i32
    scf.if %5 {
      %c0_8 = arith.constant 0 : index
      %c0_9 = arith.constant 0 : index
      %12 = vector.load %arg6[%c0_8, %c0_9] : memref<8x128xf32, #tpu.memory_space<vmem>>, vector<8x128xf32>
      tpu.vector_store %arg6[%c0_8, %c0_9], %2 {strides = array<i32>} : memref<8x128xf32, #tpu.memory_space<vmem>>, vector<8x128xf32>,
    } else {
    }
    %c0_i32_4 = arith.constant 0 : i32
    %6 = arith.cmpi ne, %arg2, %c0_i32_4 : i32
    %7 = arith.extui %6 : i1 to i32
    %c0_i32_5 = arith.constant 0 : i32
    %8 = arith.cmpi ne, %7, %c0_i32_5 : i32
    scf.if %8 {
      %c0_8 = arith.constant 0 : index
      %c0_9 = arith.constant 0 : index
      %12 = vector.load %arg6[%c0_8, %c0_9] : memref<8x128xf32, #tpu.memory_space<vmem>>, vector<8x128xf32>
      %13 = arith.addf %12, %2 : vector<8x128xf32>
      %c0_10 = arith.constant 0 : index
      %c0_11 = arith.constant 0 : index
      %14 = vector.load %arg6[%c0_10, %c0_11] : memref<8x128xf32, #tpu.memory_space<vmem>>, vector<8x128xf32>
      tpu.vector_store %arg6[%c0_10, %c0_11], %13 {strides = array<i32>} : memref<8x128xf32, #tpu.memory_space<vmem>>, vector<8x128xf32>,
    } else {
    }
    %c0_i32_6 = arith.constant 0 : i32
    %9 = arith.cmpi eq, %arg2, %c0_i32_6 : i32
    %10 = arith.extui %9 : i1 to i32
    %c0_i32_7 = arith.constant 0 : i32
    %11 = arith.cmpi ne, %10, %c0_i32_7 : i32
    scf.if %11 {
      %c0_8 = arith.constant 0 : index
      %c0_9 = arith.constant 0 : index
      %12 = vector.load %arg6[%c0_8, %c0_9] : memref<8x128xf32, #tpu.memory_space<vmem>>, vector<8x128xf32>
      %c0_10 = arith.constant 0 : index
      %c0_11 = arith.constant 0 : index
      %13 = vector.load %arg5[%c0_10, %c0_11] : memref<1x128xf32, #tpu.memory_space<vmem>>, vector<1x128xf32>
      %14 = vector.broadcast %13 : vector<1x128xf32> to vector<8x128xf32>
      %15 = arith.addf %12, %14 : vector<8x128xf32>
      %c0_12 = arith.constant 0 : index
      %c0_13 = arith.constant 0 : index
      %16 = vector.load %arg6[%c0_12, %c0_13] : memref<8x128xf32, #tpu.memory_space<vmem>>, vector<8x128xf32>
      tpu.vector_store %arg6[%c0_12, %c0_13], %15 {strides = array<i32>} : memref<8x128xf32, #tpu.memory_space<vmem>>, vector<8x128xf32>,
    } else {
    }
    return
  }
  func.func @transform_0(%arg0: i32, %arg1: i32, %arg2: i32) -> (i32, i32) {
    %c0_i32 = arith.constant 0 : i32
    return %arg0, %arg2 : i32, i32
  }
  func.func @transform_1(%arg0: i32, %arg1: i32, %arg2: i32) -> (i32, i32) {
    %c0_i32 = arith.constant 0 : i32
    return %arg2, %arg1 : i32, i32
  }
  func.func @transform_2(%arg0: i32, %arg1: i32, %arg2: i32) -> (i32, i32) {
    %c0_i32 = arith.constant 0 : i32
    %c0_i32_0 = arith.constant 0 : i32
    return %c0_i32, %arg1 : i32, i32
  }
  func.func @transform_3(%arg0: i32, %arg1: i32, %arg2: i32) -> (i32, i32) {
    %c0_i32 = arith.constant 0 : i32
    return %arg0, %arg1 : i32, i32
  }
}

</mosaic_0001>

<llo_original>
// kernel: linear_forward.1
$region0: #{linear_forward.1}
  #allocation0 [shape = 'u32[]', space=smem, size = 0x4, offset = 0x4, fixed_abs, tag = 'smem constant byte address 0x4 - core index']
  #allocation1 [shape = 'u32[144,128]{1,0:T(1,128)}', space=vmem, size = 0x12000, scoped, tag = 'internal scratch']
  %s0 = inlined_call_operand.vmem [shape: f32[8,32], index: 0, kind: input, shape index: {}]
  %s1 = inlined_call_operand.vmem [shape: f32[32,128], index: 1, kind: input, shape index: {}]
  %s2 = inlined_call_operand.vmem [shape: f32[1,128], index: 2, kind: input, shape index: {}]
  %s3 = inlined_call_operand.hbm [shape: f32[8,128], index: 3, kind: output, shape index: {}]
  %s4 = sld [smem:[#allocation0]]
  $region34: #{linear_forward.1} parent=0
    _
  %s6 = ssub.s32 1, %s4
  %s7 = scalar_select 0, %s6, %s4
  $region1: #{linear_forward.1} parent=0
    #allocation2 [shape = 'u8[4096]{0}', space=vmem, size = 0x1000, scoped, tag = 'output window, operand 0, single buffered']
    #allocation3 [shape = 's32[1]{0}', space=sflag, size = 0x4, scoped, tag = 'scoped memory for linear_forward.1']
    %8 = vsyncpa [#allocation3], 0
    // Predicated region
    $region2: #{linear_forward.1} parent=1 // pred_check
      _
    $region3: #{linear_forward.1} parent=1 // pred_check_branch
      %10 = sbr.rel (0) target = $region5
    $region4: #{linear_forward.1} parent=1 // pred_region
      _
    $region5: #{linear_forward.1} parent=1 // pred_fallthru
      _
    // Predicated region
    $region6: #{linear_forward.1} parent=1 // pred_check
      _
    $region7: #{linear_forward.1} parent=1 // pred_check_branch
      %12 = sbr.rel (0) target = $region9
    $region8: #{linear_forward.1} parent=1 // pred_region
      _
    $region9: #{linear_forward.1} parent=1 // pred_fallthru
      _
    // Predicated region
    $region10: #{linear_forward.1} parent=1 // pred_check
      _
    $region11: #{linear_forward.1} parent=1 // pred_check_branch
      %14 = sbr.rel (0) target = $region13
    $region12: #{linear_forward.1} parent=1 // pred_region
      _
    $region13: #{linear_forward.1} parent=1 // pred_fallthru
      _
    %v15 = vld [vmem:[%s0] sm:$0xff]
    %v16 = vld [vmem:[%s1] sm:$0xff]
    %v17 = vld [vmem:[%s1 + $0x8] sm:$0xff]
    %v18 = vld [vmem:[%s1 + $0x10] sm:$0xff]
    %v19 = vld [vmem:[%s1 + $0x18] sm:$0xff]
    %vm20 = vcmask 261120
    %v22 = vsel %vm20, %v15, 0
    %24 = vmatprep.subr.mxu0 0.0
    %25 = vmatpush1.msra.mxu0 0.0
    %26 = vmatprep.subr.mxu0 0.0
    %27 = vmatpush1.msra.mxu0 0.0
    %28 = vmatprep.subr.mxu0 0.0
    %29 = vmatpush1.msra.mxu0 0.0
    %30 = vmatprep.subr.mxu0 0.0
    %31 = vmatpush1.msra.mxu0 0.0
    %32 = vmatprep.subr.mxu0 0.0
    %33 = vmatpush1.msra.mxu0 0.0
    %34 = vmatprep.subr.mxu0 0.0
    %35 = vmatpush1.msra.mxu0 0.0
    %36 = vmatprep.subr.mxu0 0.0
    %37 = vmatpush1.msra.mxu0 0.0
    %38 = vmatprep.subr.mxu0 0.0
    %39 = vmatpush1.msra.mxu0 0.0
    %40 = vmatprep.subr.mxu0 0.0
    %41 = vmatpush1.msra.mxu0 0.0
    %42 = vmatprep.subr.mxu0 0.0
    %43 = vmatpush1.msra.mxu0 0.0
    %44 = vmatprep.subr.mxu0 0.0
    %45 = vmatpush1.msra.mxu0 0.0
    %46 = vmatprep.subr.mxu0 0.0
    %47 = vmatpush1.msra.mxu0 0.0
    %48 = vmatprep.subr.mxu0 0.0
    %49 = vmatpush1.msra.mxu0 %v19
    %50 = vmatprep.subr.mxu0 0.0
    %51 = vmatpush1.msra.mxu0 %v18
    %52 = vmatprep.subr.mxu0 0.0
    %53 = vmatpush1.msra.mxu0 %v17
    %54 = vmatprep.subr.mxu0 0.0
    %55 = vmatpush1.msra.mxu0 %v16
    %56 = vmatprep.subr.mxu0 0.0
    %57 = vmatpush2.msra.mxu0 0.0
    %58 = vmatprep.subr.mxu0 0.0
    %59 = vmatpush2.msra.mxu0 0.0
    %60 = vmatprep.subr.mxu0 0.0
    %61 = vmatpush2.msra.mxu0 0.0
    %62 = vmatprep.subr.mxu0 0.0
    %63 = vmatpush2.msra.mxu0 0.0
    %64 = vmatprep.subr.mxu0 0.0
    %65 = vmatpush2.msra.mxu0 0.0
    %66 = vmatprep.subr.mxu0 0.0
    %67 = vmatpush2.msra.mxu0 0.0
    %68 = vmatprep.subr.mxu0 0.0
    %69 = vmatpush2.msra.mxu0 0.0
    %70 = vmatprep.subr.mxu0 0.0
    %71 = vmatpush2.msra.mxu0 0.0
    %72 = vmatprep.subr.mxu0 0.0
    %73 = vmatpush2.msra.mxu0 0.0
    %74 = vmatprep.subr.mxu0 0.0
    %75 = vmatpush2.msra.mxu0 0.0
    %76 = vmatprep.subr.mxu0 0.0
    %77 = vmatpush2.msra.mxu0 0.0
    %78 = vmatprep.subr.mxu0 0.0
    %79 = vmatpush2.msra.mxu0 0.0
    %80 = vmatprep.subr.mxu0 0.0
    %81 = vmatpush2.msra.mxu0 0.0
    %82 = vmatprep.subr.mxu0 0.0
    %83 = vmatpush2.msra.mxu0 0.0
    %84 = vmatprep.subr.mxu0 0.0
    %85 = vmatpush2.msra.mxu0 0.0
    %86 = vmatprep.subr.mxu0 0.0
    %87 = vmatpush2.msra.mxu0 0.0
    %88 = vmatprep.mubr.f32.mxu0 0.0
    %89 = vmatmul.mubr.f32.gmra.mxu0 %v22
    %v90 = vpop.f32.mrf.mxu0
    %v91 = vadd.f32 0.0, %v90
    %v92 = vpop.f32.mrf.mxu0
    %93 = vdwg.mxu0
    %p94 = scmp.eq.s32.totalorder 0, 0
    // Predicated region
    $region14: #{linear_forward.1} parent=1 // pred_check
      %p95 = pneg %p94
    $region15: #{linear_forward.1} parent=1 // pred_check_branch
      %97 = sbr.rel (%p95) target = $region17
    $region16: #{linear_forward.1} parent=1 // pred_region
      %98 = vst [vmem:[#allocation2] sm:$0xff] %v91
    $region17: #{linear_forward.1} parent=1 // pred_fallthru
      _
    %p99 = scmp.ne.s32.totalorder 0, 0
    // Predicated region
    $region18: #{linear_forward.1} parent=1 // pred_check
      %p100 = pneg %p99
    $region19: #{linear_forward.1} parent=1 // pred_check_branch
      %102 = sbr.rel (%p100) target = $region21
    $region20: #{linear_forward.1} parent=1 // pred_region
      %v103 = vld [vmem:[#allocation2] sm:$0xff]
      %v104 = vadd.f32 %v103, %v91
      %105 = vst [vmem:[#allocation2] sm:$0xff] %v104
    $region21: #{linear_forward.1} parent=1 // pred_fallthru
      _
    // Predicated region
    $region22: #{linear_forward.1} parent=1 // pred_check
      %p106 = pneg %p94
    $region23: #{linear_forward.1} parent=1 // pred_check_branch
      %108 = sbr.rel (%p106) target = $region25
    $region24: #{linear_forward.1} parent=1 // pred_region
      %v109 = vld [vmem:[#allocation2] sm:$0xff]
      %v110 = vld [vmem:[%s2] sm:$0x1]
      %v112 = vlaneseq
      %v113 = vshrl.u32 %v112, 7
      %v114 = vsub.s32 0, %v113
      %v115 = vrot.slane %v110, %v114
      %v117 = vadd.f32 %v109, %v115
      %118 = vst [vmem:[#allocation2] sm:$0xff] %v117
    $region25: #{linear_forward.1} parent=1 // pred_fallthru
      _
    // Predicated region
    $region26: #{linear_forward.1} parent=1 // pred_check
      _
    $region27: #{linear_forward.1} parent=1 // pred_check_branch
      %120 = sbr.rel (0) target = $region29
    $region28: #{linear_forward.1} parent=1 // pred_region
      %s122 = ssub.s32 128, 128
      %123 = vsyncadd [#allocation3], %s122
      %s125 = sshll.u32 [#allocation2], 4
      %s126 = int_to_ptr.vmem [resolvable:$true] %s125
      %128 = dma.vmem_to_hbm [thread:$0]  %s126, 128, %s3, [#allocation3]
    $region29: #{linear_forward.1} parent=1 // pred_fallthru
      _
    // Predicated region
    $region30: #{linear_forward.1} parent=1 // pred_check
      _
    $region31: #{linear_forward.1} parent=1 // pred_check_branch
      %130 = sbr.rel (0) target = $region33
    $region32: #{linear_forward.1} parent=1 // pred_region
      %131 = dma.done [#allocation3], 128
    $region33: #{linear_forward.1} parent=1 // pred_fallthru
      _
    %132 = vsyncpa [#allocation3], 1

</llo_original>
